<compile_context>
chip_gen: v7x
topology: tpu7x:2x2x1
jax: 0.10.0
libtpu: 0.0.40
codegen_flags: <defaults>
</compile_context>

<pallas_src>
import functools

import jax
import jax.numpy as jnp
from jax.experimental import pallas as pl
from jax.experimental.pallas import tpu as pltpu


def self_attn_kernel(g_ref, xk_ref, v_ref, out_ref, m_sc, l_sc, acc_sc,
                     *, n_valid, n_padded):
    """One (batch, query-tile, kv-tile) grid step.

    g_ref   : VMEM (Tq, Cp) bf16  precomputed query-side G = [x,1] @ Ma
    xk_ref  : VMEM (Tk, Cp) bf16  kv-side augmented x (keys)
    v_ref   : VMEM (Tk, Cp) bf16  precomputed values V = [x,1] @ Wva
    out_ref : VMEM (Tq, Cp) f32   attention output tile (resident across kv axis)
    m_sc,l_sc : VMEM (Tq, 1) f32  online-softmax running max / sum
    acc_sc  : VMEM (Tq, Cp) f32   output accumulator
    """
    kv = pl.program_id(2)
    nk = pl.num_programs(2)

    @pl.when(kv == 0)
    def _init():
        m_sc[...] = jnp.full_like(m_sc, -jnp.inf)
        l_sc[...] = jnp.zeros_like(l_sc)
        acc_sc[...] = jnp.zeros_like(acc_sc)

    # Energy block: (Tq, Tk), contraction over the full padded channel dim (Cp).
    s = jnp.dot(g_ref[...], xk_ref[...].T, preferred_element_type=jnp.float32)

    if n_padded != n_valid:
        # Mask padded kv columns (row padding < Tk, so the first kv tile always
        # contains at least one valid column and the running max stays finite).
        tk = xk_ref.shape[0]
        col = kv * tk + jax.lax.broadcasted_iota(jnp.int32, s.shape, 1)
        s = jnp.where(col < n_valid, s, -1e30)

    # Online softmax (f32).
    m_prev = m_sc[...]                                                   # (Tq, 1)
    m_new = jnp.maximum(m_prev, jnp.max(s, axis=-1, keepdims=True))
    alpha = jnp.exp(m_prev - m_new)                                      # (Tq, 1)
    p = jnp.exp(s - m_new)                                               # (Tq, Tk)

    l_sc[...] = alpha * l_sc[...] + jnp.sum(p, axis=-1, keepdims=True)
    acc_sc[...] = alpha * acc_sc[...] + jnp.dot(
        p.astype(jnp.bfloat16), v_ref[...], preferred_element_type=jnp.float32)
    m_sc[...] = m_new

    @pl.when(kv == nk - 1)
    def _finalize():
        inv_l = pl.reciprocal(l_sc[...], approx=True)                    # (Tq, 1)
        out_ref[...] = acc_sc[...] * inv_l                               # lane-dense f32 store


def _round_up(x, m):
    return ((x + m - 1) // m) * m


def _cdiv(a, b):
    return -(-a // b)


def _choose_tiles(n, batch):
    """Pick (Tq, Tk): MXU-aligned, VMEM-bounded, megacore-friendly."""
    # Query tile: multiple of 8, prefer MXU-sized (256/512), cap 512.
    if n >= 512:
        tq = 512
    elif n >= 256:
        tq = 256
    else:
        tq = _round_up(n, 8)
    # v7x has 2 TensorCores sharded over the "parallel" grid axes: make sure
    # there are at least 2 units of work (B * num_query_tiles >= 2).
    while batch * _cdiv(n, tq) < 2 and tq > 8:
        tq = max(8, _round_up(tq // 2, 8))
    # KV tile: a multiple of Tq (so one padded row count serves both axes),
    # large enough to amortize per-step overhead, capped so we never over-pad
    # and never exceed ~2048 (keeps (Tq,Tk) f32 softmax temporaries a few MiB).
    tk = min(2048, 4 * tq, _round_up(n, tq))
    return tq, tk


def self_attn_forward(x_nchw, wq, bq, wk, bk, wv, bv, gamma):
    """x_nchw: (B, C, W, H) f32.  Conv2d(k=1) weights in PyTorch (out, in) layout."""
    B, C, W, H = x_nchw.shape
    N = W * H
    Ca = C + 1                                # augmented channels (bias column)
    Cp = _round_up(Ca, 128)                   # padded to 128 lanes

    Tq, Tk = _choose_tiles(N, B)
    N_pad = _round_up(N, Tk)                  # multiple of both Tq and Tk

    # NCHW -> (B, N, C) channels-last, then append the ones column (bias fold).
    x_bnc = jnp.transpose(x_nchw.reshape(B, C, N), (0, 2, 1)).astype(jnp.float32)
    x_aug = jnp.concatenate([x_bnc, jnp.ones((B, N, 1), jnp.float32)], axis=-1)

    wqf = jnp.asarray(wq, jnp.float32)
    wkf = jnp.asarray(wk, jnp.float32)
    wvf = jnp.asarray(wv, jnp.float32)
    bqf = jnp.asarray(bq, jnp.float32)
    bkf = jnp.asarray(bk, jnp.float32)
    bvf = jnp.asarray(bv, jnp.float32)

    # Folded Q/K bilinear form on augmented channels:
    #   energy[i,j] = [x_i,1] @ Ma @ [x_j,1]^T  with  Ma = [[Wq^T Wk, Wq^T bk],
    #                                                       [bq^T Wk, bq.bk ]]
    ma = jnp.zeros((Ca, Ca), jnp.float32)
    ma = ma.at[:C, :C].set(wqf.T @ wkf)
    ma = ma.at[:C, C].set(wqf.T @ bkf)
    ma = ma.at[C, :C].set(wkf.T @ bqf)
    ma = ma.at[C, C].set(jnp.dot(bqf, bkf))

    # Folded value projection: V = [x, 1] @ Wva  (= x Wv^T + bv)
    wva = jnp.concatenate([wvf.T, bvf[None, :]], axis=0)                 # (Ca, C)

    # Precompute query-side G and values V once, in f32, with a single bf16
    # rounding on the way to HBM; pad channels to Cp lanes and rows to N_pad.
    g = jnp.einsum('bnc,cd->bnd', x_aug, ma)                             # (B, N, Ca)
    v = jnp.einsum('bnc,cd->bnd', x_aug, wva)                            # (B, N, C)

    def _pad_bf16(a):
        return jnp.pad(
            a, ((0, 0), (0, N_pad - N), (0, Cp - a.shape[-1]))).astype(jnp.bfloat16)

    g_bf = _pad_bf16(g)                                                  # (B, N_pad, Cp)
    xk_bf = _pad_bf16(x_aug)                                             # (B, N_pad, Cp)
    v_bf = _pad_bf16(v)                                                  # (B, N_pad, Cp)

    grid = (B, N_pad // Tq, N_pad // Tk)

    kernel = functools.partial(self_attn_kernel, n_valid=N, n_padded=N_pad)

    out_padded = pl.pallas_call(
        kernel,
        out_shape=jax.ShapeDtypeStruct((B, N_pad, Cp), jnp.float32),
        grid=grid,
        in_specs=[
            pl.BlockSpec((None, Tq, Cp), lambda b, i, k: (b, i, 0)),     # G (query tile)
            pl.BlockSpec((None, Tk, Cp), lambda b, i, k: (b, k, 0)),     # keys (kv tile)
            pl.BlockSpec((None, Tk, Cp), lambda b, i, k: (b, k, 0)),     # values (kv tile)
        ],
        out_specs=pl.BlockSpec((None, Tq, Cp), lambda b, i, k: (b, i, 0)),
        scratch_shapes=[
            pltpu.VMEM((Tq, 1), jnp.float32),     # running max
            pltpu.VMEM((Tq, 1), jnp.float32),     # running sum
            pltpu.VMEM((Tq, Cp), jnp.float32),    # output accumulator
        ],
        compiler_params=pltpu.CompilerParams(
            dimension_semantics=("parallel", "parallel", "arbitrary"),
            # Worst case (Tq=512, Tk=2048): ~3 MiB buffers + ~12-16 MiB softmax
            # temporaries; 48 MiB leaves headroom and stays within v7x's 64 MiB.
            vmem_limit_bytes=48 * 1024 * 1024),
    )(g_bf, xk_bf, v_bf)

    # Drop row/channel padding, apply gamma + residual in f32, back to NCHW.
    attn_out = out_padded[:, :N, :C]
    out_bnc = jnp.asarray(gamma, jnp.float32) * attn_out + x_bnc
    return jnp.transpose(out_bnc, (0, 2, 1)).reshape(B, C, W, H)


def self_attn_reference(x, wq, bq, wk, bk, wv, bv, gamma):
    """Pure-JAX f32 reference mirroring the PyTorch forward (NCHW)."""
    B, C, W, H = x.shape
    N = W * H
    xf = x.reshape(B, C, N)                                      # (B, C, N)
    q = jnp.einsum('oc,bcn->bon', wq, xf) + bq[None, :, None]    # (B, Cq, N)
    k = jnp.einsum('oc,bcn->bon', wk, xf) + bk[None, :, None]    # (B, Cq, N)
    v = jnp.einsum('oc,bcn->bon', wv, xf) + bv[None, :, None]    # (B, C, N)
    energy = jnp.einsum('bci,bcj->bij', q, k)                    # (B, N, N)
    att = jax.nn.softmax(energy, axis=-1)
    out = jnp.einsum('bcj,bij->bci', v, att)                     # (B, C, N)
    out = out.reshape(B, C, W, H)
    return gamma * out + x


if __name__ == "__main__":
    key = jax.random.PRNGKey(0)

    def run_case(case_key, B, C, W, H):
        Cq = max(C // 8, 1)
        ks = jax.random.split(case_key, 7)
        x = jax.random.normal(ks[0], (B, C, W, H), dtype=jnp.float32)
        # Conv2d(k=1) weights: (out, in); deterministic init.
        wq = 0.1 * jax.random.normal(ks[1], (Cq, C), dtype=jnp.float32)
        bq = 0.1 * jax.random.normal(ks[2], (Cq,), dtype=jnp.float32)
        wk = 0.1 * jax.random.normal(ks[3], (Cq, C), dtype=jnp.float32)
        bk = 0.1 * jax.random.normal(ks[4], (Cq,), dtype=jnp.float32)
        wv = 0.1 * jax.random.normal(ks[5], (C, C), dtype=jnp.float32)
        bv = 0.1 * jax.random.normal(ks[6], (C,), dtype=jnp.float32)
        # PyTorch initializes gamma = 0 (out == x); use a nonzero value so the
        # attention path is actually exercised and checked.
        gamma = jnp.float32(0.1)

        out = self_attn_forward(x, wq, bq, wk, bk, wv, bv, gamma)
        out = jax.block_until_ready(out)

        ref = self_attn_reference(x, wq, bq, wk, bk, wv, bv, gamma)
        assert out.shape == (B, C, W, H)
        err = float(jnp.max(jnp.abs(out - ref)))
        assert err < 1e-2, f"mismatch vs reference ({B},{C},{W},{H}): {err}"

    k1, k2 = jax.random.split(key)
    # Case 1: tiles divide N exactly (no masking path).
    run_case(k1, 2, 16, 8, 8)
    # Case 2: awkward N = 63 exercises the masked-tail path and the
    # megacore query-tile shrink (B = 1).
    run_case(k2, 1, 32, 9, 7)

    print("KERNEL_OK")
</pallas_src>

<mosaic_0001>
module attributes {stable_mosaic.version = 11 : i64} {
  func.func @self_attn_kernel(%arg0: i32, %arg1: i32, %arg2: i32, %arg3: memref<1x64x128xbf16, #tpu.memory_space<vmem>>, %arg4: memref<1x64x128xbf16, #tpu.memory_space<vmem>>, %arg5: memref<1x64x128xbf16, #tpu.memory_space<vmem>>, %arg6: memref<1x64x128xf32, #tpu.memory_space<vmem>>, %arg7: memref<64x1xf32, #tpu.memory_space<vmem>>, %arg8: memref<64x1xf32, #tpu.memory_space<vmem>>, %arg9: memref<64x128xf32, #tpu.memory_space<vmem>>) attributes {dimension_semantics = [#tpu.dimension_semantics<parallel>, #tpu.dimension_semantics<parallel>, #tpu.dimension_semantics<arbitrary>], iteration_bounds = array<i64: 2, 1, 1>, scalar_prefetch = 0 : i64, scratch_operands = 3 : i64, tpu.core_type = #tpu.core_type<tc>, window_params = [{transform_indices = @transform_0, window_bounds = array<i64: 1, 64, 128>}, {transform_indices = @transform_1, window_bounds = array<i64: 1, 64, 128>}, {transform_indices = @transform_2, window_bounds = array<i64: 1, 64, 128>}, {transform_indices = @transform_3, window_bounds = array<i64: 1, 64, 128>}]} {
    %c0_i32 = arith.constant 0 : i32
    %0 = arith.cmpi eq, %arg2, %c0_i32 : i32
    %1 = arith.extui %0 : i1 to i32
    %c0_i32_0 = arith.constant 0 : i32
    %2 = arith.cmpi ne, %1, %c0_i32_0 : i32
    scf.if %2 {
      %cst_26 = arith.constant 0xFF800000 : f32
      %37 = vector.broadcast %cst_26 : f32 to vector<64x1xf32>
      %c0_27 = arith.constant 0 : index
      %c0_28 = arith.constant 0 : index
      %38 = vector.load %arg7[%c0_27, %c0_28] : memref<64x1xf32, #tpu.memory_space<vmem>>, vector<64x1xf32>
      tpu.vector_store %arg7[%c0_27, %c0_28], %37 {strides = array<i32>} : memref<64x1xf32, #tpu.memory_space<vmem>>, vector<64x1xf32>,
      %cst_29 = arith.constant 0.000000e+00 : f32
      %39 = vector.broadcast %cst_29 : f32 to vector<64x1xf32>
      %c0_30 = arith.constant 0 : index
      %c0_31 = arith.constant 0 : index
      %40 = vector.load %arg8[%c0_30, %c0_31] : memref<64x1xf32, #tpu.memory_space<vmem>>, vector<64x1xf32>
      tpu.vector_store %arg8[%c0_30, %c0_31], %39 {strides = array<i32>} : memref<64x1xf32, #tpu.memory_space<vmem>>, vector<64x1xf32>,
      %cst_32 = arith.constant 0.000000e+00 : f32
      %41 = vector.broadcast %cst_32 : f32 to vector<64x128xf32>
      %c0_33 = arith.constant 0 : index
      %c0_34 = arith.constant 0 : index
      %42 = vector.load %arg9[%c0_33, %c0_34] : memref<64x128xf32, #tpu.memory_space<vmem>>, vector<64x128xf32>
      tpu.vector_store %arg9[%c0_33, %c0_34], %41 {strides = array<i32>} : memref<64x128xf32, #tpu.memory_space<vmem>>, vector<64x128xf32>,
    } else {
    }
    %c0 = arith.constant 0 : index
    %c0_1 = arith.constant 0 : index
    %c0_2 = arith.constant 0 : index
    %3 = vector.load %arg3[%c0, %c0_1, %c0_2] : memref<1x64x128xbf16, #tpu.memory_space<vmem>>, vector<1x64x128xbf16>
    %4 = vector.shape_cast %3 : vector<1x64x128xbf16> to vector<64x128xbf16>
    %c0_3 = arith.constant 0 : index
    %c0_4 = arith.constant 0 : index
    %c0_5 = arith.constant 0 : index
    %5 = vector.load %arg4[%c0_3, %c0_4, %c0_5] : memref<1x64x128xbf16, #tpu.memory_space<vmem>>, vector<1x64x128xbf16>
    %6 = vector.shape_cast %5 : vector<1x64x128xbf16> to vector<64x128xbf16>
    %7 = tpu.transpose %6, [1, 0] : vector<64x128xbf16> -> vector<128x64xbf16>
    %cst = arith.constant dense<0.000000e+00> : vector<64x64xf32>
    %8 = tpu.matmul %4, %7, %cst {dimension_numbers = #tpu.dot_dimension_numbers<[1], [0], [0], [1], [0, 0, 1, 1], [], []>} : vector<64x128xbf16>, vector<128x64xbf16>, vector<64x64xf32> -> vector<64x64xf32>
    %c0_6 = arith.constant 0 : index
    %c0_7 = arith.constant 0 : index
    %9 = vector.load %arg7[%c0_6, %c0_7] : memref<64x1xf32, #tpu.memory_space<vmem>>, vector<64x1xf32>
    %cst_8 = arith.constant dense<0xFF800000> : vector<64xf32>
    %10 = vector.multi_reduction <maximumf>, %8, %cst_8 [1] : vector<64x64xf32> to vector<64xf32>
    %11 = vector.shape_cast %10 : vector<64xf32> to vector<64x1xf32>
    %12 = arith.maximumf %9, %11 : vector<64x1xf32>
    %13 = arith.subf %9, %12 : vector<64x1xf32>
    %14 = math.exp %13 : vector<64x1xf32>
    %15 = vector.broadcast %12 : vector<64x1xf32> to vector<64x64xf32>
    %16 = arith.subf %8, %15 : vector<64x64xf32>
    %17 = math.exp %16 : vector<64x64xf32>
    %c0_9 = arith.constant 0 : index
    %c0_10 = arith.constant 0 : index
    %18 = vector.load %arg8[%c0_9, %c0_10] : memref<64x1xf32, #tpu.memory_space<vmem>>, vector<64x1xf32>
    %19 = arith.mulf %14, %18 : vector<64x1xf32>
    %cst_11 = arith.constant dense<0.000000e+00> : vector<64xf32>
    %20 = vector.multi_reduction <add>, %17, %cst_11 [1] : vector<64x64xf32> to vector<64xf32>
    %21 = vector.shape_cast %20 : vector<64xf32> to vector<64x1xf32>
    %22 = arith.addf %19, %21 : vector<64x1xf32>
    %c0_12 = arith.constant 0 : index
    %c0_13 = arith.constant 0 : index
    %23 = vector.load %arg8[%c0_12, %c0_13] : memref<64x1xf32, #tpu.memory_space<vmem>>, vector<64x1xf32>
    tpu.vector_store %arg8[%c0_12, %c0_13], %22 {strides = array<i32>} : memref<64x1xf32, #tpu.memory_space<vmem>>, vector<64x1xf32>,
    %c0_14 = arith.constant 0 : index
    %c0_15 = arith.constant 0 : index
    %24 = vector.load %arg9[%c0_14, %c0_15] : memref<64x128xf32, #tpu.memory_space<vmem>>, vector<64x128xf32>
    %25 = vector.broadcast %14 : vector<64x1xf32> to vector<64x128xf32>
    %26 = arith.mulf %25, %24 : vector<64x128xf32>
    %27 = arith.truncf %17 : vector<64x64xf32> to vector<64x64xbf16>
    %c0_16 = arith.constant 0 : index
    %c0_17 = arith.constant 0 : index
    %c0_18 = arith.constant 0 : index
    %28 = vector.load %arg5[%c0_16, %c0_17, %c0_18] : memref<1x64x128xbf16, #tpu.memory_space<vmem>>, vector<1x64x128xbf16>
    %29 = vector.shape_cast %28 : vector<1x64x128xbf16> to vector<64x128xbf16>
    %cst_19 = arith.constant dense<0.000000e+00> : vector<64x128xf32>
    %30 = tpu.matmul %27, %29, %cst_19 {dimension_numbers = #tpu.dot_dimension_numbers<[1], [0], [0], [1], [0, 0, 1, 1], [], []>} : vector<64x64xbf16>, vector<64x128xbf16>, vector<64x128xf32> -> vector<64x128xf32>
    %31 = arith.addf %26, %30 : vector<64x128xf32>
    %c0_20 = arith.constant 0 : index
    %c0_21 = arith.constant 0 : index
    %32 = vector.load %arg9[%c0_20, %c0_21] : memref<64x128xf32, #tpu.memory_space<vmem>>, vector<64x128xf32>
    tpu.vector_store %arg9[%c0_20, %c0_21], %31 {strides = array<i32>} : memref<64x128xf32, #tpu.memory_space<vmem>>, vector<64x128xf32>,
    %c0_22 = arith.constant 0 : index
    %c0_23 = arith.constant 0 : index
    %33 = vector.load %arg7[%c0_22, %c0_23] : memref<64x1xf32, #tpu.memory_space<vmem>>, vector<64x1xf32>
    tpu.vector_store %arg7[%c0_22, %c0_23], %12 {strides = array<i32>} : memref<64x1xf32, #tpu.memory_space<vmem>>, vector<64x1xf32>,
    %c0_i32_24 = arith.constant 0 : i32
    %34 = arith.cmpi eq, %arg2, %c0_i32_24 : i32
    %35 = arith.extui %34 : i1 to i32
    %c0_i32_25 = arith.constant 0 : i32
    %36 = arith.cmpi ne, %35, %c0_i32_25 : i32
    scf.if %36 {
      %c0_26 = arith.constant 0 : index
      %c0_27 = arith.constant 0 : index
      %37 = vector.load %arg8[%c0_26, %c0_27] : memref<64x1xf32, #tpu.memory_space<vmem>>, vector<64x1xf32>
      %38 = tpu.reciprocal %37 {approx = true} : vector<64x1xf32> -> vector<64x1xf32>
      %c0_28 = arith.constant 0 : index
      %c0_29 = arith.constant 0 : index
      %39 = vector.load %arg9[%c0_28, %c0_29] : memref<64x128xf32, #tpu.memory_space<vmem>>, vector<64x128xf32>
      %40 = vector.broadcast %38 : vector<64x1xf32> to vector<64x128xf32>
      %41 = arith.mulf %39, %40 : vector<64x128xf32>
      %c0_30 = arith.constant 0 : index
      %c0_31 = arith.constant 0 : index
      %c0_32 = arith.constant 0 : index
      %42 = vector.load %arg6[%c0_30, %c0_31, %c0_32] : memref<1x64x128xf32, #tpu.memory_space<vmem>>, vector<1x64x128xf32>
      %43 = vector.shape_cast %42 : vector<1x64x128xf32> to vector<64x128xf32>
      %44 = vector.shape_cast %41 : vector<64x128xf32> to vector<1x64x128xf32>
      tpu.vector_store %arg6[%c0_30, %c0_31, %c0_32], %44 {strides = array<i32>} : memref<1x64x128xf32, #tpu.memory_space<vmem>>, vector<1x64x128xf32>,
    } else {
    }
    return
  }
  func.func @transform_0(%arg0: i32, %arg1: i32, %arg2: i32) -> (i32, i32, i32) {
    %c0_i32 = arith.constant 0 : i32
    %c0_i32_0 = arith.constant 0 : i32
    return %arg0, %arg1, %c0_i32 : i32, i32, i32
  }
  func.func @transform_1(%arg0: i32, %arg1: i32, %arg2: i32) -> (i32, i32, i32) {
    %c0_i32 = arith.constant 0 : i32
    %c0_i32_0 = arith.constant 0 : i32
    return %arg0, %arg2, %c0_i32 : i32, i32, i32
  }
  func.func @transform_2(%arg0: i32, %arg1: i32, %arg2: i32) -> (i32, i32, i32) {
    %c0_i32 = arith.constant 0 : i32
    %c0_i32_0 = arith.constant 0 : i32
    return %arg0, %arg2, %c0_i32 : i32, i32, i32
  }
  func.func @transform_3(%arg0: i32, %arg1: i32, %arg2: i32) -> (i32, i32, i32) {
    %c0_i32 = arith.constant 0 : i32
    %c0_i32_0 = arith.constant 0 : i32
    return %arg0, %arg1, %c0_i32 : i32, i32, i32
  }
}

</mosaic_0001>

<llo_original>
// kernel: tpu_custom_call.1
$region0: #{tpu_custom_call.1}
  #allocation0 [shape = 'u32[]', space=smem, size = 0x4, offset = 0x4, fixed_abs, tag = 'smem constant byte address 0x4 - core index']
  #allocation1 [shape = 'u32[144,128]{1,0:T(1,128)}', space=vmem, size = 0x12000, scoped, tag = 'internal scratch']
  #allocation2 [shape = 'f32[64,1]{1,0:T(8,128)}', space=vmem, size = 0x8000, scoped, tag = 'scratch operand']
  #allocation3 [shape = 'f32[64,1]{1,0:T(8,128)}', space=vmem, size = 0x8000, scoped, tag = 'scratch operand']
  #allocation4 [shape = 'f32[64,128]{1,0:T(8,128)}', space=vmem, size = 0x8000, scoped, tag = 'scratch operand']
  %s0 = inlined_call_operand.hbm [shape: bf16[2,64,128], index: 0, kind: input, shape index: {}]
  %s1 = inlined_call_operand.hbm [shape: bf16[2,64,128], index: 1, kind: input, shape index: {}]
  %s2 = inlined_call_operand.hbm [shape: bf16[2,64,128], index: 2, kind: input, shape index: {}]
  %s3 = inlined_call_operand.hbm [shape: f32[2,64,128], index: 3, kind: output, shape index: {}]
  %s4 = sld [smem:[#allocation0]]
  $region65: #{tpu_custom_call.1} parent=0
    _
  %s6 = ssub.s32 1, %s4
  %s7 = scalar_select 0, %s6, %s4
  $region1: #{tpu_custom_call.1} parent=0
    #allocation5 [shape = 'u8[32768]{0}', space=vmem, size = 0x8000, scoped, tag = 'input window, operand 0']
    #allocation6 [shape = 's32[2]{0}', space=sflag, size = 0x8, scoped, tag = 'scoped memory for tpu_custom_call.1']
    #allocation7 [shape = 's32[2]{0}', space=sflag, size = 0x8, scoped, tag = 'scoped memory for tpu_custom_call.1']
    #allocation8 [shape = 'u8[32768]{0}', space=vmem, size = 0x8000, scoped, tag = 'input window, operand 1']
    #allocation9 [shape = 's32[2]{0}', space=sflag, size = 0x8, scoped, tag = 'scoped memory for tpu_custom_call.1']
    #allocation10 [shape = 'u8[32768]{0}', space=vmem, size = 0x8000, scoped, tag = 'input window, operand 2']
    #allocation11 [shape = 'u8[65536]{0}', space=vmem, size = 0x10000, scoped, tag = 'output window, operand 0']
    %8 = vsyncpa [#allocation6], 0
    %s9 = scalar_lea.sflag [#allocation6], 1
    %10 = vsyncpa %s9, 0
    %11 = vsyncpa [#allocation9], 0
    %s12 = scalar_lea.sflag [#allocation9], 1
    %13 = vsyncpa %s12, 0
    %14 = vsyncpa [#allocation7], 0
    %s15 = scalar_lea.sflag [#allocation7], 1
    %16 = vsyncpa %s15, 0
    loop: start=0, step=1, limit=4
    $region2: #{tpu_custom_call.1} parent=1 // loop_pre_header
      _
    $region3: #{tpu_custom_call.1} parent=1 // loop_header
      %s18 = sphi 0, %s22
      %p19 = scmp.ge.s32.totalorder %s18, 4
      %s25 = sphi 0, %s44
      %s26 = sphi 0, %s40
      %s27 = sphi 0, %s36
      %s28 = sphi 0, %s25
      %s29 = sphi 0, %s26
      %s30 = sphi 0, %s27
      %s31 = sphi 0, %s28
      %s32 = sphi 0, %s29
      %s33 = sphi 0, %s30
      %s49 = sphi 0, %s51
      %s52 = sphi 0, %s49
      %s53 = sphi 0, %s52
      %s69 = sphi 0, %s53
      %s77 = sphi 0, %s79
      %s80 = sphi 0, %s77
      %s81 = sphi 0, %s80
      %s97 = sphi 0, %s81
      %s105 = sphi 0, %s107
      %s108 = sphi 0, %s105
      %s109 = sphi 0, %s108
      %s125 = sphi 0, %s109
      %s133 = sphi 0, %s135
      %s136 = sphi 0, %s133
      %s137 = sphi 0, %s136
      %s153 = sphi 0, %s137
    $region4: #{tpu_custom_call.1} parent=1 // loop_header_branch
      %21 = sbr.rel (%p19) target = $region8
    $region5: #{tpu_custom_call.1} parent=1 // loop_body
      %s23 = ssub.s32 %s18, 1
      %s24 = ssub.s32 %s18, 2
      %s34 = sadd.s32 1, %s27
      %p35 = scmp.ge.s32.totalorder %s34, 1
      %s36 = scalar_select %p35, 0, %s34
      %s37 = sadd.s32 1, %s26
      %s38 = scalar_select %p35, %s37, %s26
      %p39 = scmp.ge.s32.totalorder %s38, 1
      %s40 = scalar_select %p39, 0, %s38
      %s41 = sadd.s32 1, %s25
      %s42 = scalar_select %p39, %s41, %s25
      %p43 = scmp.ge.s32.totalorder %s42, 2
      %s44 = scalar_select %p43, 0, %s42
      %s45 = ssub.s32 %s25, %s44
      %s46 = ssub.s32 %s26, %s40
      %s47 = sor.u32 %s45, %s46
      %p48 = scmp.eq.s32.totalorder %s47, 0
      %s50 = sadd.s32 %s49, 1
      %s51 = scalar_select %p48, %s49, %s50
      %p54 = pneg %p48
      %p55 = scmp.eq.s32.totalorder %s18, 1
      %p56 = por %p54, %p55
      %p57 = scmp.ne.s32.totalorder %s49, %s52
      %p58 = scmp.eq.s32.totalorder %s18, 0
      %p59 = por %p57, %p58
      %p60 = scmp.ne.s32.totalorder %s49, %s52
      %p61 = scmp.eq.s32.totalorder %s23, 1
      %p62 = por %p60, %p61
      %p63 = scmp.ne.s32.totalorder %s52, %s53
      %p64 = scmp.eq.s32.totalorder %s23, 0
      %p65 = por %p63, %p64
      %p66 = scmp.ne.s32.totalorder %s52, %s53
      %p67 = scmp.eq.s32.totalorder %s24, 1
      %p68 = por %p66, %p67
      %p70 = scmp.ne.s32.totalorder %s53, %s69
      %p71 = scmp.eq.s32.totalorder %s24, 0
      %p72 = por %p70, %p71
      %s73 = ssub.s32 %s25, %s44
      %s74 = ssub.s32 %s27, %s36
      %s75 = sor.u32 %s73, %s74
      %p76 = scmp.eq.s32.totalorder %s75, 0
      %s78 = sadd.s32 %s77, 1
      %s79 = scalar_select %p76, %s77, %s78
      %p82 = pneg %p76
      %p83 = scmp.eq.s32.totalorder %s18, 1
      %p84 = por %p82, %p83
      %p85 = scmp.ne.s32.totalorder %s77, %s80
      %p86 = scmp.eq.s32.totalorder %s18, 0
      %p87 = por %p85, %p86
      %p88 = scmp.ne.s32.totalorder %s77, %s80
      %p89 = scmp.eq.s32.totalorder %s23, 1
      %p90 = por %p88, %p89
      %p91 = scmp.ne.s32.totalorder %s80, %s81
      %p92 = scmp.eq.s32.totalorder %s23, 0
      %p93 = por %p91, %p92
      %p94 = scmp.ne.s32.totalorder %s80, %s81
      %p95 = scmp.eq.s32.totalorder %s24, 1
      %p96 = por %p94, %p95
      %p98 = scmp.ne.s32.totalorder %s81, %s97
      %p99 = scmp.eq.s32.totalorder %s24, 0
      %p100 = por %p98, %p99
      %s101 = ssub.s32 %s25, %s44
      %s102 = ssub.s32 %s27, %s36
      %s103 = sor.u32 %s101, %s102
      %p104 = scmp.eq.s32.totalorder %s103, 0
      %s106 = sadd.s32 %s105, 1
      %s107 = scalar_select %p104, %s105, %s106
      %p110 = pneg %p104
      %p111 = scmp.eq.s32.totalorder %s18, 1
      %p112 = por %p110, %p111
      %p113 = scmp.ne.s32.totalorder %s105, %s108
      %p114 = scmp.eq.s32.totalorder %s18, 0
      %p115 = por %p113, %p114
      %p116 = scmp.ne.s32.totalorder %s105, %s108
      %p117 = scmp.eq.s32.totalorder %s23, 1
      %p118 = por %p116, %p117
      %p119 = scmp.ne.s32.totalorder %s108, %s109
      %p120 = scmp.eq.s32.totalorder %s23, 0
      %p121 = por %p119, %p120
      %p122 = scmp.ne.s32.totalorder %s108, %s109
      %p123 = scmp.eq.s32.totalorder %s24, 1
      %p124 = por %p122, %p123
      %p126 = scmp.ne.s32.totalorder %s109, %s125
      %p127 = scmp.eq.s32.totalorder %s24, 0
      %p128 = por %p126, %p127
      %s129 = ssub.s32 %s25, %s44
      %s130 = ssub.s32 %s26, %s40
      %s131 = sor.u32 %s129, %s130
      %p132 = scmp.eq.s32.totalorder %s131, 0
      %s134 = sadd.s32 %s133, 1
      %s135 = scalar_select %p132, %s133, %s134
      %p138 = pneg %p132
      %p139 = scmp.eq.s32.totalorder %s18, 1
      %p140 = por %p138, %p139
      %p141 = scmp.ne.s32.totalorder %s133, %s136
      %p142 = scmp.eq.s32.totalorder %s18, 0
      %p143 = por %p141, %p142
      %p144 = scmp.ne.s32.totalorder %s133, %s136
      %p145 = scmp.eq.s32.totalorder %s23, 1
      %p146 = por %p144, %p145
      %p147 = scmp.ne.s32.totalorder %s136, %s137
      %p148 = scmp.eq.s32.totalorder %s23, 0
      %p149 = por %p147, %p148
      %p150 = scmp.ne.s32.totalorder %s136, %s137
      %p151 = scmp.eq.s32.totalorder %s24, 1
      %p152 = por %p150, %p151
      %p154 = scmp.ne.s32.totalorder %s137, %s153
      %p155 = scmp.eq.s32.totalorder %s24, 0
      %p156 = por %p154, %p155
      %p157 = scmp.le.s32.totalorder 1, %s18
      %p158 = scmp.lt.s32.totalorder %s18, 3
      %p159 = pnand %p157, %p158
      %p160 = pneg %p159
      // Predicated region
      $region9: #{tpu_custom_call.1} parent=5 // pred_check
        _
      $region10: #{tpu_custom_call.1} parent=5 // pred_check_branch
        %162 = sbr.rel (%p159) target = $region12
      $region11: #{tpu_custom_call.1} parent=5 // pred_region
        %s163 = ssub.s32 %s18, 1
      $region12: #{tpu_custom_call.1} parent=5 // pred_fallthru
        _
      %p164 = scmp.lt.s32.totalorder %s18, 2
      // Predicated region
      $region13: #{tpu_custom_call.1} parent=5 // pred_check
        %p165 = pneg %p164
      $region14: #{tpu_custom_call.1} parent=5 // pred_check_branch
        %167 = sbr.rel (%p165) target = $region16
      $region15: #{tpu_custom_call.1} parent=5 // pred_region
        // Predicated region
        $region17: #{tpu_custom_call.1} parent=15 // pred_check
          %p168 = pneg %p59
        $region18: #{tpu_custom_call.1} parent=15 // pred_check_branch
          %170 = sbr.rel (%p168) target = $region20
        $region19: #{tpu_custom_call.1} parent=15 // pred_region
          %s171 = sand.u32 %s49, 1
          %s172 = scalar_lea.sflag [#allocation6], %s171
          %s173 = sand.u32 %s49, 1
          %s174 = smul.addr %s173, 32
          %s175 = scalar_lea.vmem [#allocation5], %s174
          %s176 = smul.u32 8, %s26
          %s178 = ssub.s32 512, 512
          %179 = vsyncadd %s172, %s178
          %s180 = smul.addr %s25, 8
          %s181 = sadd.s32 %s176, %s180
          %s182 = smul.addr %s181, 64
          %s183 = scalar_lea.hbm %s0, %s182
          %s184 = sshll.u32 %s175, 4
          %s185 = int_to_ptr.vmem [resolvable:$true] %s184
          %190 = dma.hbm_to_vmem [thread:$0]  %s183, 512, %s185, %s172, 64, 64, 4
        $region20: #{tpu_custom_call.1} parent=15 // pred_fallthru
          _
        // Predicated region
        $region21: #{tpu_custom_call.1} parent=15 // pred_check
          %p191 = pneg %p87
        $region22: #{tpu_custom_call.1} parent=15 // pred_check_branch
          %193 = sbr.rel (%p191) target = $region24
        $region23: #{tpu_custom_call.1} parent=15 // pred_region
          %s194 = sand.u32 %s18, 1
          %s195 = scalar_lea.sflag [#allocation9], %s194
          %s196 = sand.u32 %s77, 1
          %s197 = smul.addr %s196, 32
          %s198 = scalar_lea.vmem [#allocation8], %s197
          %s199 = smul.u32 8, %s27
          %s201 = ssub.s32 512, 512
          %202 = vsyncadd %s195, %s201
          %s203 = smul.addr %s25, 8
          %s204 = sadd.s32 %s199, %s203
          %s205 = smul.addr %s204, 64
          %s206 = scalar_lea.hbm %s1, %s205
          %s207 = sshll.u32 %s198, 4
          %s208 = int_to_ptr.vmem [resolvable:$true] %s207
          %213 = dma.hbm_to_vmem [thread:$0]  %s206, 512, %s208, %s195, 64, 64, 4
        $region24: #{tpu_custom_call.1} parent=15 // pred_fallthru
          _
        // Predicated region
        $region25: #{tpu_custom_call.1} parent=15 // pred_check
          %p214 = pneg %p115
        $region26: #{tpu_custom_call.1} parent=15 // pred_check_branch
          %216 = sbr.rel (%p214) target = $region28
        $region27: #{tpu_custom_call.1} parent=15 // pred_region
          %s217 = sand.u32 %s18, 1
          %s218 = scalar_lea.sflag [#allocation9], %s217
          %s219 = sand.u32 %s105, 1
          %s220 = smul.addr %s219, 32
          %s221 = scalar_lea.vmem [#allocation10], %s220
          %s222 = smul.u32 8, %s27
          %s224 = ssub.s32 512, 512
          %225 = vsyncadd %s218, %s224
          %s226 = smul.addr %s25, 8
          %s227 = sadd.s32 %s222, %s226
          %s228 = smul.addr %s227, 64
          %s229 = scalar_lea.hbm %s2, %s228
          %s230 = sshll.u32 %s221, 4
          %s231 = int_to_ptr.vmem [resolvable:$true] %s230
          %236 = dma.hbm_to_vmem [thread:$0]  %s229, 512, %s231, %s218, 64, 64, 4
        $region28: #{tpu_custom_call.1} parent=15 // pred_fallthru
          _
      $region16: #{tpu_custom_call.1} parent=5 // pred_fallthru
        _
      %p237 = scmp.le.s32.totalorder 1, %s18
      %p238 = scmp.lt.s32.totalorder %s18, 3
      %p239 = pnand %p237, %p238
      %p240 = pneg %p239
      // Predicated region
      $region29: #{tpu_custom_call.1} parent=5 // pred_check
        _
      $region30: #{tpu_custom_call.1} parent=5 // pred_check_branch
        %242 = sbr.rel (%p239) target = $region32
      $region31: #{tpu_custom_call.1} parent=5 // pred_region
        %s243 = ssub.s32 %s18, 1
        %s244 = sand.u32 %s52, 1
        %s245 = scalar_lea.sflag [#allocation6], %s244
        %s246 = sand.u32 %s52, 1
        %s247 = smul.addr %s246, 32
        %s248 = scalar_lea.vmem [#allocation5], %s247
        // Predicated region
        $region33: #{tpu_custom_call.1} parent=31 // pred_check
          %p249 = pneg %p65
        $region34: #{tpu_custom_call.1} parent=31 // pred_check_branch
          %251 = sbr.rel (%p249) target = $region36
        $region35: #{tpu_custom_call.1} parent=31 // pred_region
          %252 = dma.done %s245, 512
        $region36: #{tpu_custom_call.1} parent=31 // pred_fallthru
          _
        %s253 = sand.u32 %s23, 1
        %s254 = scalar_lea.sflag [#allocation9], %s253
        %s255 = sand.u32 %s80, 1
        %s256 = smul.addr %s255, 32
        %s257 = scalar_lea.vmem [#allocation8], %s256
        // Predicated region
        $region37: #{tpu_custom_call.1} parent=31 // pred_check
          %p258 = pneg %p93
        $region38: #{tpu_custom_call.1} parent=31 // pred_check_branch
          %260 = sbr.rel (%p258) target = $region40
        $region39: #{tpu_custom_call.1} parent=31 // pred_region
          %261 = dma.done %s254, 512
        $region40: #{tpu_custom_call.1} parent=31 // pred_fallthru
          _
        %s262 = sand.u32 %s23, 1
        %s263 = scalar_lea.sflag [#allocation9], %s262
        %s264 = sand.u32 %s108, 1
        %s265 = smul.addr %s264, 32
        %s266 = scalar_lea.vmem [#allocation10], %s265
        // Predicated region
        $region41: #{tpu_custom_call.1} parent=31 // pred_check
          %p267 = pneg %p121
        $region42: #{tpu_custom_call.1} parent=31 // pred_check_branch
          %269 = sbr.rel (%p267) target = $region44
        $region43: #{tpu_custom_call.1} parent=31 // pred_region
          %270 = dma.done %s263, 512
        $region44: #{tpu_custom_call.1} parent=31 // pred_fallthru
          _
        %s271 = sand.u32 %s52, 1
        %s272 = scalar_lea.sflag [#allocation6], %s271
        %s273 = sand.u32 %s52, 1
        %s274 = smul.addr %s273, 32
        %s275 = scalar_lea.vmem [#allocation5], %s274
        %p276 = pneg %p65
        %p277 = pneg %p62
        %s278 = sand.u32 %s23, 1
        %s279 = scalar_lea.sflag [#allocation9], %s278
        %s280 = sand.u32 %s80, 1
        %s281 = smul.addr %s280, 32
        %s282 = scalar_lea.vmem [#allocation8], %s281
        %p283 = pneg %p93
        %p284 = pneg %p90
        %s285 = sand.u32 %s23, 1
        %s286 = scalar_lea.sflag [#allocation9], %s285
        %s287 = sand.u32 %s108, 1
        %s288 = smul.addr %s287, 32
        %s289 = scalar_lea.vmem [#allocation10], %s288
        %p290 = pneg %p121
        %p291 = pneg %p118
        %p292 = pneg %p149
        %p293 = pneg %p146
        %s294 = sand.u32 %s136, 1
        %s295 = scalar_lea.sflag [#allocation7], %s294
        %s296 = sand.u32 %s136, 1
        %s297 = smul.addr %s296, 64
        %s298 = scalar_lea.vmem [#allocation11], %s297
        %s299 = smul.u32 8, %s29
        %s300 = smul.u32 8, %s30
        %s301 = smul.u32 8, %s30
        %s302 = smul.u32 8, %s29
        %p304 = scmp.eq.s32.totalorder %s30, 0
        // Predicated region
        $region45: #{tpu_custom_call.1} parent=31 // pred_check
          %p305 = pneg %p304
        $region46: #{tpu_custom_call.1} parent=31 // pred_check_branch
          %307 = sbr.rel (%p305) target = $region48
        $region47: #{tpu_custom_call.1} parent=31 // pred_region
          %vm308 = vcmask 7168
          %309 = vst.msk [vmem:[#allocation2] sm:$0xff] %vm308, -inf
          %310 = vst.msk [vmem:[#allocation2 + $0x8] sm:$0xff] %vm308, -inf
          %311 = vst.msk [vmem:[#allocation2 + $0x10] sm:$0xff] %vm308, -inf
          %312 = vst.msk [vmem:[#allocation2 + $0x18] sm:$0xff] %vm308, -inf
          %313 = vst.msk [vmem:[#allocation2 + $0x20] sm:$0xff] %vm308, -inf
          %314 = vst.msk [vmem:[#allocation2 + $0x28] sm:$0xff] %vm308, -inf
          %315 = vst.msk [vmem:[#allocation2 + $0x30] sm:$0xff] %vm308, -inf
          %316 = vst.msk [vmem:[#allocation2 + $0x38] sm:$0xff] %vm308, -inf
          %317 = vst.msk [vmem:[#allocation3] sm:$0xff] %vm308, 0.0
          %318 = vst.msk [vmem:[#allocation3 + $0x8] sm:$0xff] %vm308, 0.0
          %319 = vst.msk [vmem:[#allocation3 + $0x10] sm:$0xff] %vm308, 0.0
          %320 = vst.msk [vmem:[#allocation3 + $0x18] sm:$0xff] %vm308, 0.0
          %321 = vst.msk [vmem:[#allocation3 + $0x20] sm:$0xff] %vm308, 0.0
          %322 = vst.msk [vmem:[#allocation3 + $0x28] sm:$0xff] %vm308, 0.0
          %323 = vst.msk [vmem:[#allocation3 + $0x30] sm:$0xff] %vm308, 0.0
          %324 = vst.msk [vmem:[#allocation3 + $0x38] sm:$0xff] %vm308, 0.0
          %325 = vst [vmem:[#allocation4] sm:$0xff] 0.0
          %326 = vst [vmem:[#allocation4 + $0x8] sm:$0xff] 0.0
          %327 = vst [vmem:[#allocation4 + $0x10] sm:$0xff] 0.0
          %328 = vst [vmem:[#allocation4 + $0x18] sm:$0xff] 0.0
          %329 = vst [vmem:[#allocation4 + $0x20] sm:$0xff] 0.0
          %330 = vst [vmem:[#allocation4 + $0x28] sm:$0xff] 0.0
          %331 = vst [vmem:[#allocation4 + $0x30] sm:$0xff] 0.0
          %332 = vst [vmem:[#allocation4 + $0x38] sm:$0xff] 0.0
        $region48: #{tpu_custom_call.1} parent=31 // pred_fallthru
          _
        %v333 = vld [vmem:[%s248] sm:$0xf]
        %v334 = vld [vmem:[%s248 + $0x4] sm:$0xf]
        %v335 = vld [vmem:[%s248 + $0x8] sm:$0xf]
        %v336 = vld [vmem:[%s248 + $0xc] sm:$0xf]
        %v337 = vld [vmem:[%s248 + $0x10] sm:$0xf]
        %v338 = vld [vmem:[%s248 + $0x14] sm:$0xf]
        %v339 = vld [vmem:[%s248 + $0x18] sm:$0xf]
        %v340 = vld [vmem:[%s248 + $0x1c] sm:$0xf]
        %v341 = vld [vmem:[%s257] sm:$0xf]
        %v342 = vld [vmem:[%s257 + $0x4] sm:$0xf]
        %v343 = vld [vmem:[%s257 + $0x8] sm:$0xf]
        %v344 = vld [vmem:[%s257 + $0xc] sm:$0xf]
        %v345 = vld [vmem:[%s257 + $0x10] sm:$0xf]
        %v346 = vld [vmem:[%s257 + $0x14] sm:$0xf]
        %v347 = vld [vmem:[%s257 + $0x18] sm:$0xf]
        %v348 = vld [vmem:[%s257 + $0x1c] sm:$0xf]
        %v357 = vunpack.c.l.b16 %v333
        %v358 = vunpack.c.l.b16 %v334
        %v359 = vunpack.c.l.b16 %v335
        %v360 = vunpack.c.l.b16 %v336
        %v361 = vunpack.c.l.b16 %v337
        %v362 = vunpack.c.l.b16 %v338
        %v363 = vunpack.c.l.b16 %v339
        %v364 = vunpack.c.l.b16 %v340
        %v365 = vpack.c.b16 %v358, %v357
        %v366 = vpack.c.b16 %v360, %v359
        %v367 = vpack.c.b16 %v362, %v361
        %v368 = vpack.c.b16 %v364, %v363
        %v381 = vunpack.c.l.b16 %v341
        %v382 = vunpack.c.l.b16 %v342
        %v383 = vunpack.c.l.b16 %v343
        %v384 = vunpack.c.l.b16 %v344
        %v385 = vunpack.c.l.b16 %v345
        %v386 = vunpack.c.l.b16 %v346
        %v387 = vunpack.c.l.b16 %v347
        %v388 = vunpack.c.l.b16 %v348
        %v389 = vpack.c.b16 %v382, %v381
        %v390 = vpack.c.b16 %v384, %v383
        %v391 = vpack.c.b16 %v386, %v385
        %v392 = vpack.c.b16 %v388, %v387
        %397 = vmatprep.subr.bf16.mxu0 0
        %398 = vmatpush1.bf16.xpose.msra.mxu0 %v389
        %399 = vmatprep.subr.bf16.mxu0 0
        %400 = vmatpush1.bf16.xpose.msra.mxu0 %v390
        %401 = vmatprep.subr.bf16.mxu0 0
        %402 = vmatpush1.bf16.xpose.msra.mxu0 %v391
        %403 = vmatprep.subr.bf16.mxu0 0
        %404 = vmatpush1.bf16.xpose.msra.mxu0 %v392
        %405 = vmatprep.subr.bf16.mxu0 0
        %406 = vmatpush1.bf16.xpose.msra.mxu0 0
        %407 = vmatprep.subr.bf16.mxu0 0
        %408 = vmatpush1.bf16.xpose.msra.mxu0 0
        %409 = vmatprep.subr.bf16.mxu0 0
        %410 = vmatpush1.bf16.xpose.msra.mxu0 0
        %411 = vmatprep.subr.bf16.mxu0 0
        %412 = vmatpush1.bf16.xpose.msra.mxu0 0
        %413 = vmatprep.subr.bf16.mxu0 0
        %414 = vmatpush1.bf16.xpose.msra.mxu0 0
        %415 = vmatprep.subr.bf16.mxu0 0
        %416 = vmatpush1.bf16.xpose.msra.mxu0 0
        %417 = vmatprep.subr.bf16.mxu0 0
        %418 = vmatpush1.bf16.xpose.msra.mxu0 0
        %419 = vmatprep.subr.bf16.mxu0 0
        %420 = vmatpush1.bf16.xpose.msra.mxu0 0
        %421 = vmatprep.subr.bf16.mxu0 0
        %422 = vmatpush1.bf16.xpose.msra.mxu0 0
        %423 = vmatprep.subr.bf16.mxu0 0
        %424 = vmatpush1.bf16.xpose.msra.mxu0 0
        %425 = vmatprep.subr.bf16.mxu0 0
        %426 = vmatpush1.bf16.xpose.msra.mxu0 0
        %427 = vmatprep.subr.bf16.mxu0 0
        %428 = vmatpush1.bf16.xpose.msra.mxu0 0
        %429 = vmatprep.mubr.bf16.mxu0 0
        %430 = vmatmul.mubr.bf16.gmra.mrb[0].mxu0 %v365
        %v431 = vpop.f32.mrb[0].mxu0
        %v432 = vadd.f32 0.0, %v431
        %v433 = vpop.f32.mrb[0].mxu0
        %v434 = vpop.f32.mrb[0].mxu0
        %v435 = vadd.f32 0.0, %v434
        %v436 = vpop.f32.mrb[0].mxu0
        %437 = vmatprep.mubr.bf16.mxu0 0
        %438 = vmatmul.mubr.bf16.gmra.mrb[0].mxu0 %v366
        %v439 = vpop.f32.mrb[0].mxu0
        %v440 = vadd.f32 0.0, %v439
        %v441 = vpop.f32.mrb[0].mxu0
        %v442 = vpop.f32.mrb[0].mxu0
        %v443 = vadd.f32 0.0, %v442
        %v444 = vpop.f32.mrb[0].mxu0
        %445 = vmatprep.mubr.bf16.mxu0 0
        %446 = vmatmul.mubr.bf16.gmra.mrb[0].mxu0 %v367
        %v447 = vpop.f32.mrb[0].mxu0
        %v448 = vadd.f32 0.0, %v447
        %v449 = vpop.f32.mrb[0].mxu0
        %v450 = vpop.f32.mrb[0].mxu0
        %v451 = vadd.f32 0.0, %v450
        %v452 = vpop.f32.mrb[0].mxu0
        %453 = vmatprep.mubr.bf16.mxu0 0
        %454 = vmatmul.mubr.bf16.gmra.mrb[0].mxu0 %v368
        %v455 = vpop.f32.mrb[0].mxu0
        %v456 = vadd.f32 0.0, %v455
        %v457 = vpop.f32.mrb[0].mxu0
        %v458 = vpop.f32.mrb[0].mxu0
        %v459 = vadd.f32 0.0, %v458
        %v460 = vpop.f32.mrb[0].mxu0
        %461 = vdwg.mxu0
        %v462 = vld [vmem:[#allocation2] sm:$0xff]
        %v463 = vld [vmem:[#allocation2 + $0x8] sm:$0xff]
        %v464 = vld [vmem:[#allocation2 + $0x10] sm:$0xff]
        %v465 = vld [vmem:[#allocation2 + $0x18] sm:$0xff]
        %v466 = vld [vmem:[#allocation2 + $0x20] sm:$0xff]
        %v467 = vld [vmem:[#allocation2 + $0x28] sm:$0xff]
        %v468 = vld [vmem:[#allocation2 + $0x30] sm:$0xff]
        %v469 = vld [vmem:[#allocation2 + $0x38] sm:$0xff]
        %vm470 = vcmask 523264
        %v471 = vsel %vm470, %v432, -inf
        %472 = vmax.xlane.f32.xlu0 %v471
        %v473 = vpop.xlane.xlu0 %472
        %v474 = vsel %vm470, %v435, -inf
        %475 = vmax.xlane.f32.xlu0 %v474
        %v476 = vpop.xlane.xlu0 %475
        %v477 = vsel %vm470, %v440, -inf
        %478 = vmax.xlane.f32.xlu0 %v477
        %v479 = vpop.xlane.xlu0 %478
        %v480 = vsel %vm470, %v443, -inf
        %481 = vmax.xlane.f32.xlu0 %v480
        %v482 = vpop.xlane.xlu0 %481
        %v483 = vsel %vm470, %v448, -inf
        %484 = vmax.xlane.f32.xlu0 %v483
        %v485 = vpop.xlane.xlu0 %484
        %v486 = vsel %vm470, %v451, -inf
        %487 = vmax.xlane.f32.xlu0 %v486
        %v488 = vpop.xlane.xlu0 %487
        %v489 = vsel %vm470, %v456, -inf
        %490 = vmax.xlane.f32.xlu0 %v489
        %v491 = vpop.xlane.xlu0 %490
        %v492 = vsel %vm470, %v459, -inf
        %493 = vmax.xlane.f32.xlu0 %v492
        %v494 = vpop.xlane.xlu0 %493
        %v495 = vmax.f32 %v462, %v473
        %v496 = vmax.f32 %v463, %v476
        %v497 = vmax.f32 %v464, %v479
        %v498 = vmax.f32 %v465, %v482
        %v499 = vmax.f32 %v466, %v485
        %v500 = vmax.f32 %v467, %v488
        %v501 = vmax.f32 %v468, %v491
        %v502 = vmax.f32 %v469, %v494
        %v503 = vsub.f32 %v462, %v495
        %v504 = vsub.f32 %v463, %v496
        %v505 = vsub.f32 %v464, %v497
        %v506 = vsub.f32 %v465, %v498
        %v507 = vsub.f32 %v466, %v499
        %v508 = vsub.f32 %v467, %v500
        %v509 = vsub.f32 %v468, %v501
        %v510 = vsub.f32 %v469, %v502
        %v511 = vmul.f32 %v503, 1.442695
        %v512 = vpow.pop %v511
        %v513 = vmul.f32 %v504, 1.442695
        %v514 = vpow.pop %v513
        %v515 = vmul.f32 %v505, 1.442695
        %v516 = vpow.pop %v515
        %v517 = vmul.f32 %v506, 1.442695
        %v518 = vpow.pop %v517
        %v519 = vmul.f32 %v507, 1.442695
        %v520 = vpow.pop %v519
        %v521 = vmul.f32 %v508, 1.442695
        %v522 = vpow.pop %v521
        %v523 = vmul.f32 %v509, 1.442695
        %v524 = vpow.pop %v523
        %v525 = vmul.f32 %v510, 1.442695
        %v526 = vpow.pop %v525
        %528 = vset.pattern.permute.xlu0 0
        %529 = vperm.xlu0 %528, %v495
        %v530 = vpop.permute.xlu0 %529
        %533 = vset.pattern.permute.xlu0 0
        %534 = vperm.xlu0 %533, %v496
        %v535 = vpop.permute.xlu0 %534
        %538 = vset.pattern.permute.xlu0 0
        %539 = vperm.xlu0 %538, %v497
        %v540 = vpop.permute.xlu0 %539
        %543 = vset.pattern.permute.xlu0 0
        %544 = vperm.xlu0 %543, %v498
        %v545 = vpop.permute.xlu0 %544
        %548 = vset.pattern.permute.xlu0 0
        %549 = vperm.xlu0 %548, %v499
        %v550 = vpop.permute.xlu0 %549
        %553 = vset.pattern.permute.xlu0 0
        %554 = vperm.xlu0 %553, %v500
        %v555 = vpop.permute.xlu0 %554
        %558 = vset.pattern.permute.xlu0 0
        %559 = vperm.xlu0 %558, %v501
        %v560 = vpop.permute.xlu0 %559
        %563 = vset.pattern.permute.xlu0 0
        %564 = vperm.xlu0 %563, %v502
        %v565 = vpop.permute.xlu0 %564
        %v567 = vsub.f32 %v432, %v530
        %v568 = vsub.f32 %v435, %v535
        %v569 = vsub.f32 %v440, %v540
        %v570 = vsub.f32 %v443, %v545
        %v571 = vsub.f32 %v448, %v550
        %v572 = vsub.f32 %v451, %v555
        %v573 = vsub.f32 %v456, %v560
        %v574 = vsub.f32 %v459, %v565
        %v575 = vmul.f32 %v567, 1.442695
        %v576 = vpow.pop %v575
        %v577 = vmul.f32 %v568, 1.442695
        %v578 = vpow.pop %v577
        %v579 = vmul.f32 %v569, 1.442695
        %v580 = vpow.pop %v579
        %v581 = vmul.f32 %v570, 1.442695
        %v582 = vpow.pop %v581
        %v583 = vmul.f32 %v571, 1.442695
        %v584 = vpow.pop %v583
        %v585 = vmul.f32 %v572, 1.442695
        %v586 = vpow.pop %v585
        %v587 = vmul.f32 %v573, 1.442695
        %v588 = vpow.pop %v587
        %v589 = vmul.f32 %v574, 1.442695
        %v590 = vpow.pop %v589
        %v591 = vld [vmem:[#allocation3] sm:$0xff]
        %v592 = vld [vmem:[#allocation3 + $0x8] sm:$0xff]
        %v593 = vld [vmem:[#allocation3 + $0x10] sm:$0xff]
        %v594 = vld [vmem:[#allocation3 + $0x18] sm:$0xff]
        %v595 = vld [vmem:[#allocation3 + $0x20] sm:$0xff]
        %v596 = vld [vmem:[#allocation3 + $0x28] sm:$0xff]
        %v597 = vld [vmem:[#allocation3 + $0x30] sm:$0xff]
        %v598 = vld [vmem:[#allocation3 + $0x38] sm:$0xff]
        %v599 = vmul.f32 %v512, %v591
        %v600 = vmul.f32 %v514, %v592
        %v601 = vmul.f32 %v516, %v593
        %v602 = vmul.f32 %v518, %v594
        %v603 = vmul.f32 %v520, %v595
        %v604 = vmul.f32 %v522, %v596
        %v605 = vmul.f32 %v524, %v597
        %v606 = vmul.f32 %v526, %v598
        %v607 = vsel %vm470, %v576, 0.0
        %608 = vadd.xlane.f32.xlu0 %v607
        %v609 = vpop.xlane.xlu0 %608
        %v610 = vsel %vm470, %v578, 0.0
        %611 = vadd.xlane.f32.xlu0 %v610
        %v612 = vpop.xlane.xlu0 %611
        %v613 = vsel %vm470, %v580, 0.0
        %614 = vadd.xlane.f32.xlu0 %v613
        %v615 = vpop.xlane.xlu0 %614
        %v616 = vsel %vm470, %v582, 0.0
        %617 = vadd.xlane.f32.xlu0 %v616
        %v618 = vpop.xlane.xlu0 %617
        %v619 = vsel %vm470, %v584, 0.0
        %620 = vadd.xlane.f32.xlu0 %v619
        %v621 = vpop.xlane.xlu0 %620
        %v622 = vsel %vm470, %v586, 0.0
        %623 = vadd.xlane.f32.xlu0 %v622
        %v624 = vpop.xlane.xlu0 %623
        %v625 = vsel %vm470, %v588, 0.0
        %626 = vadd.xlane.f32.xlu0 %v625
        %v627 = vpop.xlane.xlu0 %626
        %v628 = vsel %vm470, %v590, 0.0
        %629 = vadd.xlane.f32.xlu0 %v628
        %v630 = vpop.xlane.xlu0 %629
        %v631 = vadd.f32 %v599, %v609
        %v632 = vadd.f32 %v600, %v612
        %v633 = vadd.f32 %v601, %v615
        %v634 = vadd.f32 %v602, %v618
        %v635 = vadd.f32 %v603, %v621
        %v636 = vadd.f32 %v604, %v624
        %v637 = vadd.f32 %v605, %v627
        %v638 = vadd.f32 %v606, %v630
        %vm639 = vcmask 7168
        %640 = vst.msk [vmem:[#allocation3] sm:$0xff] %vm639, %v631
        %641 = vst.msk [vmem:[#allocation3 + $0x8] sm:$0xff] %vm639, %v632
        %642 = vst.msk [vmem:[#allocation3 + $0x10] sm:$0xff] %vm639, %v633
        %643 = vst.msk [vmem:[#allocation3 + $0x18] sm:$0xff] %vm639, %v634
        %644 = vst.msk [vmem:[#allocation3 + $0x20] sm:$0xff] %vm639, %v635
        %645 = vst.msk [vmem:[#allocation3 + $0x28] sm:$0xff] %vm639, %v636
        %646 = vst.msk [vmem:[#allocation3 + $0x30] sm:$0xff] %vm639, %v637
        %647 = vst.msk [vmem:[#allocation3 + $0x38] sm:$0xff] %vm639, %v638
        %v648 = vld [vmem:[#allocation4] sm:$0xff]
        %v649 = vld [vmem:[#allocation4 + $0x8] sm:$0xff]
        %v650 = vld [vmem:[#allocation4 + $0x10] sm:$0xff]
        %v651 = vld [vmem:[#allocation4 + $0x18] sm:$0xff]
        %v652 = vld [vmem:[#allocation4 + $0x20] sm:$0xff]
        %v653 = vld [vmem:[#allocation4 + $0x28] sm:$0xff]
        %v654 = vld [vmem:[#allocation4 + $0x30] sm:$0xff]
        %v655 = vld [vmem:[#allocation4 + $0x38] sm:$0xff]
        %657 = vset.pattern.permute.xlu0 0
        %658 = vperm.xlu0 %657, %v512
        %v659 = vpop.permute.xlu0 %658
        %662 = vset.pattern.permute.xlu0 0
        %663 = vperm.xlu0 %662, %v514
        %v664 = vpop.permute.xlu0 %663
        %667 = vset.pattern.permute.xlu0 0
        %668 = vperm.xlu0 %667, %v516
        %v669 = vpop.permute.xlu0 %668
        %672 = vset.pattern.permute.xlu0 0
        %673 = vperm.xlu0 %672, %v518
        %v674 = vpop.permute.xlu0 %673
        %677 = vset.pattern.permute.xlu0 0
        %678 = vperm.xlu0 %677, %v520
        %v679 = vpop.permute.xlu0 %678
        %682 = vset.pattern.permute.xlu0 0
        %683 = vperm.xlu0 %682, %v522
        %v684 = vpop.permute.xlu0 %683
        %687 = vset.pattern.permute.xlu0 0
        %688 = vperm.xlu0 %687, %v524
        %v689 = vpop.permute.xlu0 %688
        %692 = vset.pattern.permute.xlu0 0
        %693 = vperm.xlu0 %692, %v526
        %v694 = vpop.permute.xlu0 %693
        %v696 = vmul.f32 %v659, %v648
        %v697 = vmul.f32 %v664, %v649
        %v698 = vmul.f32 %v669, %v650
        %v699 = vmul.f32 %v674, %v651
        %v700 = vmul.f32 %v679, %v652
        %v701 = vmul.f32 %v684, %v653
        %v702 = vmul.f32 %v689, %v654
        %v703 = vmul.f32 %v694, %v655
        %v704 = vpack.c.bf16 %v578, %v576
        %v705 = vpack.c.bf16 %v582, %v580
        %v706 = vpack.c.bf16 %v586, %v584
        %v707 = vpack.c.bf16 %v590, %v588
        %v708 = vld [vmem:[%s266] sm:$0xf]
        %v709 = vld [vmem:[%s266 + $0x4] sm:$0xf]
        %v710 = vld [vmem:[%s266 + $0x8] sm:$0xf]
        %v711 = vld [vmem:[%s266 + $0xc] sm:$0xf]
        %v712 = vld [vmem:[%s266 + $0x10] sm:$0xf]
        %v713 = vld [vmem:[%s266 + $0x14] sm:$0xf]
        %v714 = vld [vmem:[%s266 + $0x18] sm:$0xf]
        %v715 = vld [vmem:[%s266 + $0x1c] sm:$0xf]
        %v724 = vunpack.c.l.b16 %v708
        %v725 = vunpack.c.l.b16 %v709
        %v726 = vunpack.c.l.b16 %v710
        %v727 = vunpack.c.l.b16 %v711
        %v728 = vunpack.c.l.b16 %v712
        %v729 = vunpack.c.l.b16 %v713
        %v730 = vunpack.c.l.b16 %v714
        %v731 = vunpack.c.l.b16 %v715
        %v732 = vpack.c.b16 %v725, %v724
        %v733 = vpack.c.b16 %v727, %v726
        %v734 = vpack.c.b16 %v729, %v728
        %v735 = vpack.c.b16 %v731, %v730
        %v741 = vsel %vm470, %v704, 0
        %v744 = vsel %vm470, %v705, 0
        %v747 = vsel %vm470, %v706, 0
        %v750 = vsel %vm470, %v707, 0
        %752 = vmatprep.subr.bf16.mxu0 0
        %753 = vmatpush1.bf16.msra.mxu0 %v732
        %754 = vmatprep.subr.bf16.mxu0 0
        %755 = vmatpush1.bf16.msra.mxu0 %v733
        %756 = vmatprep.subr.bf16.mxu0 0
        %757 = vmatpush1.bf16.msra.mxu0 %v734
        %758 = vmatprep.subr.bf16.mxu0 0
        %759 = vmatpush1.bf16.msra.mxu0 %v735
        %760 = vmatprep.subr.bf16.mxu0 0
        %761 = vmatpush1.bf16.msra.mxu0 0
        %762 = vmatprep.subr.bf16.mxu0 0
        %763 = vmatpush1.bf16.msra.mxu0 0
        %764 = vmatprep.subr.bf16.mxu0 0
        %765 = vmatpush1.bf16.msra.mxu0 0
        %766 = vmatprep.subr.bf16.mxu0 0
        %767 = vmatpush1.bf16.msra.mxu0 0
        %768 = vmatprep.subr.bf16.mxu0 0
        %769 = vmatpush1.bf16.msra.mxu0 0
        %770 = vmatprep.subr.bf16.mxu0 0
        %771 = vmatpush1.bf16.msra.mxu0 0
        %772 = vmatprep.subr.bf16.mxu0 0
        %773 = vmatpush1.bf16.msra.mxu0 0
        %774 = vmatprep.subr.bf16.mxu0 0
        %775 = vmatpush1.bf16.msra.mxu0 0
        %776 = vmatprep.subr.bf16.mxu0 0
        %777 = vmatpush1.bf16.msra.mxu0 0
        %778 = vmatprep.subr.bf16.mxu0 0
        %779 = vmatpush1.bf16.msra.mxu0 0
        %780 = vmatprep.subr.bf16.mxu0 0
        %781 = vmatpush1.bf16.msra.mxu0 0
        %782 = vmatprep.subr.bf16.mxu0 0
        %783 = vmatpush1.bf16.msra.mxu0 0
        %784 = vmatprep.mubr.bf16.mxu0 0
        %785 = vmatmul.mubr.bf16.gmra.mrb[0].mxu0 %v741
        %v786 = vpop.f32.mrb[0].mxu0
        %v787 = vadd.f32 0.0, %v786
        %v788 = vpop.f32.mrb[0].mxu0
        %v789 = vpop.f32.mrb[0].mxu0
        %v790 = vadd.f32 0.0, %v789
        %v791 = vpop.f32.mrb[0].mxu0
        %792 = vmatprep.mubr.bf16.mxu0 0
        %793 = vmatmul.mubr.bf16.gmra.mrb[0].mxu0 %v744
        %v794 = vpop.f32.mrb[0].mxu0
        %v795 = vadd.f32 0.0, %v794
        %v796 = vpop.f32.mrb[0].mxu0
        %v797 = vpop.f32.mrb[0].mxu0
        %v798 = vadd.f32 0.0, %v797
        %v799 = vpop.f32.mrb[0].mxu0
        %800 = vmatprep.mubr.bf16.mxu0 0
        %801 = vmatmul.mubr.bf16.gmra.mrb[0].mxu0 %v747
        %v802 = vpop.f32.mrb[0].mxu0
        %v803 = vadd.f32 0.0, %v802
        %v804 = vpop.f32.mrb[0].mxu0
        %v805 = vpop.f32.mrb[0].mxu0
        %v806 = vadd.f32 0.0, %v805
        %v807 = vpop.f32.mrb[0].mxu0
        %808 = vmatprep.mubr.bf16.mxu0 0
        %809 = vmatmul.mubr.bf16.gmra.mrb[0].mxu0 %v750
        %v810 = vpop.f32.mrb[0].mxu0
        %v811 = vadd.f32 0.0, %v810
        %v812 = vpop.f32.mrb[0].mxu0
        %v813 = vpop.f32.mrb[0].mxu0
        %v814 = vadd.f32 0.0, %v813
        %v815 = vpop.f32.mrb[0].mxu0
        %816 = vdwg.mxu0
        %v817 = vadd.f32 %v696, %v787
        %v818 = vadd.f32 %v697, %v790
        %v819 = vadd.f32 %v698, %v795
        %v820 = vadd.f32 %v699, %v798
        %v821 = vadd.f32 %v700, %v803
        %v822 = vadd.f32 %v701, %v806
        %v823 = vadd.f32 %v702, %v811
        %v824 = vadd.f32 %v703, %v814
        %825 = vst [vmem:[#allocation4] sm:$0xff] %v817
        %826 = vst [vmem:[#allocation4 + $0x8] sm:$0xff] %v818
        %827 = vst [vmem:[#allocation4 + $0x10] sm:$0xff] %v819
        %828 = vst [vmem:[#allocation4 + $0x18] sm:$0xff] %v820
        %829 = vst [vmem:[#allocation4 + $0x20] sm:$0xff] %v821
        %830 = vst [vmem:[#allocation4 + $0x28] sm:$0xff] %v822
        %831 = vst [vmem:[#allocation4 + $0x30] sm:$0xff] %v823
        %832 = vst [vmem:[#allocation4 + $0x38] sm:$0xff] %v824
        %833 = vst.msk [vmem:[#allocation2] sm:$0xff] %vm639, %v495
        %834 = vst.msk [vmem:[#allocation2 + $0x8] sm:$0xff] %vm639, %v496
        %835 = vst.msk [vmem:[#allocation2 + $0x10] sm:$0xff] %vm639, %v497
        %836 = vst.msk [vmem:[#allocation2 + $0x18] sm:$0xff] %vm639, %v498
        %837 = vst.msk [vmem:[#allocation2 + $0x20] sm:$0xff] %vm639, %v499
        %838 = vst.msk [vmem:[#allocation2 + $0x28] sm:$0xff] %vm639, %v500
        %839 = vst.msk [vmem:[#allocation2 + $0x30] sm:$0xff] %vm639, %v501
        %840 = vst.msk [vmem:[#allocation2 + $0x38] sm:$0xff] %vm639, %v502
        // Predicated region
        $region49: #{tpu_custom_call.1} parent=31 // pred_check
          %p841 = pneg %p304
        $region50: #{tpu_custom_call.1} parent=31 // pred_check_branch
          %843 = sbr.rel (%p841) target = $region52
        $region51: #{tpu_custom_call.1} parent=31 // pred_region
          %v844 = vld [vmem:[#allocation3] sm:$0xff]
          %v845 = vld [vmem:[#allocation3 + $0x8] sm:$0xff]
          %v846 = vld [vmem:[#allocation3 + $0x10] sm:$0xff]
          %v847 = vld [vmem:[#allocation3 + $0x18] sm:$0xff]
          %v848 = vld [vmem:[#allocation3 + $0x20] sm:$0xff]
          %v849 = vld [vmem:[#allocation3 + $0x28] sm:$0xff]
          %v850 = vld [vmem:[#allocation3 + $0x30] sm:$0xff]
          %v851 = vld [vmem:[#allocation3 + $0x38] sm:$0xff]
          %v852 = vrcp.pop %v844
          %v853 = vrcp.pop %v845
          %v854 = vrcp.pop %v846
          %v855 = vrcp.pop %v847
          %v856 = vrcp.pop %v848
          %v857 = vrcp.pop %v849
          %v858 = vrcp.pop %v850
          %v859 = vrcp.pop %v851
          %v860 = vld [vmem:[#allocation4] sm:$0xff]
          %v861 = vld [vmem:[#allocation4 + $0x8] sm:$0xff]
          %v862 = vld [vmem:[#allocation4 + $0x10] sm:$0xff]
          %v863 = vld [vmem:[#allocation4 + $0x18] sm:$0xff]
          %v864 = vld [vmem:[#allocation4 + $0x20] sm:$0xff]
          %v865 = vld [vmem:[#allocation4 + $0x28] sm:$0xff]
          %v866 = vld [vmem:[#allocation4 + $0x30] sm:$0xff]
          %v867 = vld [vmem:[#allocation4 + $0x38] sm:$0xff]
          %869 = vset.pattern.permute.xlu0 0
          %870 = vperm.xlu0 %869, %v852
          %v871 = vpop.permute.xlu0 %870
          %874 = vset.pattern.permute.xlu0 0
          %875 = vperm.xlu0 %874, %v853
          %v876 = vpop.permute.xlu0 %875
          %879 = vset.pattern.permute.xlu0 0
          %880 = vperm.xlu0 %879, %v854
          %v881 = vpop.permute.xlu0 %880
          %884 = vset.pattern.permute.xlu0 0
          %885 = vperm.xlu0 %884, %v855
          %v886 = vpop.permute.xlu0 %885
          %889 = vset.pattern.permute.xlu0 0
          %890 = vperm.xlu0 %889, %v856
          %v891 = vpop.permute.xlu0 %890
          %894 = vset.pattern.permute.xlu0 0
          %895 = vperm.xlu0 %894, %v857
          %v896 = vpop.permute.xlu0 %895
          %899 = vset.pattern.permute.xlu0 0
          %900 = vperm.xlu0 %899, %v858
          %v901 = vpop.permute.xlu0 %900
          %904 = vset.pattern.permute.xlu0 0
          %905 = vperm.xlu0 %904, %v859
          %v906 = vpop.permute.xlu0 %905
          %v908 = vmul.f32 %v860, %v871
          %v909 = vmul.f32 %v861, %v876
          %v910 = vmul.f32 %v862, %v881
          %v911 = vmul.f32 %v863, %v886
          %v912 = vmul.f32 %v864, %v891
          %v913 = vmul.f32 %v865, %v896
          %v914 = vmul.f32 %v866, %v901
          %v915 = vmul.f32 %v867, %v906
          %916 = vst [vmem:[%s298] sm:$0xff] %v908
          %917 = vst [vmem:[%s298 + $0x8] sm:$0xff] %v909
          %918 = vst [vmem:[%s298 + $0x10] sm:$0xff] %v910
          %919 = vst [vmem:[%s298 + $0x18] sm:$0xff] %v911
          %920 = vst [vmem:[%s298 + $0x20] sm:$0xff] %v912
          %921 = vst [vmem:[%s298 + $0x28] sm:$0xff] %v913
          %922 = vst [vmem:[%s298 + $0x30] sm:$0xff] %v914
          %923 = vst [vmem:[%s298 + $0x38] sm:$0xff] %v915
        $region52: #{tpu_custom_call.1} parent=31 // pred_fallthru
          _
        %s924 = sand.u32 %s136, 1
        %s925 = scalar_lea.sflag [#allocation7], %s924
        %s926 = sand.u32 %s136, 1
        %s927 = smul.addr %s926, 64
        %s928 = scalar_lea.vmem [#allocation11], %s927
        // Predicated region
        $region53: #{tpu_custom_call.1} parent=31 // pred_check
          %p929 = pneg %p146
        $region54: #{tpu_custom_call.1} parent=31 // pred_check_branch
          %931 = sbr.rel (%p929) target = $region56
        $region55: #{tpu_custom_call.1} parent=31 // pred_region
          %s932 = smul.u32 8, %s29
          %s934 = ssub.s32 1024, 1024
          %935 = vsyncadd %s925, %s934
          %s936 = smul.addr %s28, 8
          %s937 = sadd.s32 %s932, %s936
          %s938 = smul.addr %s937, 128
          %s939 = scalar_lea.hbm %s3, %s938
          %s940 = sshll.u32 %s928, 4
          %s941 = int_to_ptr.vmem [resolvable:$true] %s940
          %946 = dma.vmem_to_hbm [thread:$0]  %s941, 1024, %s939, %s925, 128, 128, 8
        $region56: #{tpu_custom_call.1} parent=31 // pred_fallthru
          _
      $region32: #{tpu_custom_call.1} parent=5 // pred_fallthru
        _
      %p947 = scmp.le.s32.totalorder 2, %s18
      // Predicated region
      $region57: #{tpu_custom_call.1} parent=5 // pred_check
        %p948 = pneg %p947
      $region58: #{tpu_custom_call.1} parent=5 // pred_check_branch
        %950 = sbr.rel (%p948) target = $region60
      $region59: #{tpu_custom_call.1} parent=5 // pred_region
        %s951 = ssub.s32 %s18, 2
        // Predicated region
        $region61: #{tpu_custom_call.1} parent=59 // pred_check
          %p952 = pneg %p152
        $region62: #{tpu_custom_call.1} parent=59 // pred_check_branch
          %954 = sbr.rel (%p952) target = $region64
        $region63: #{tpu_custom_call.1} parent=59 // pred_region
          %s955 = sand.u32 %s137, 1
          %s956 = scalar_lea.sflag [#allocation7], %s955
          %s957 = sand.u32 %s137, 1
          %s958 = smul.addr %s957, 64
          %s959 = scalar_lea.vmem [#allocation11], %s958
          %960 = dma.done %s956, 1024
        $region64: #{tpu_custom_call.1} parent=59 // pred_fallthru
          _
      $region60: #{tpu_custom_call.1} parent=5 // pred_fallthru
        _
    $region6: #{tpu_custom_call.1} parent=1 // loop_footer
      %s22 = sadd.s32 1, %s18
    $region7: #{tpu_custom_call.1} parent=1 // loop_footer_branch
      %17 = sbr.rel target = $region3
    $region8: #{tpu_custom_call.1} parent=1 // loop_exit
      _
    %961 = vsyncpa [#allocation6], 1
    %s962 = scalar_lea.sflag [#allocation6], 1
    %963 = vsyncpa %s962, 1
    %964 = vsyncpa [#allocation9], 1
    %s965 = scalar_lea.sflag [#allocation9], 1
    %966 = vsyncpa %s965, 1
    %967 = vsyncpa [#allocation7], 1
    %s968 = scalar_lea.sflag [#allocation7], 1
    %969 = vsyncpa %s968, 1

</llo_original>
